<compile_context>
chip_gen: v7x
topology: tpu7x:2x2x1
jax: 0.10.0
libtpu: 0.0.40
codegen_flags: <defaults>
</compile_context>

<pallas_src>
import functools

import jax
import jax.numpy as jnp
from jax.experimental import pallas as pl
from jax.experimental.pallas import tpu as pltpu


def _round_up(x, m):
    return ((x + m - 1) // m) * m


def _sublane_align(dtype):
    # f32 -> 8, bf16 -> 16, int8/fp8 -> 32 (sub-32-bit packs along sublanes).
    return max(8, 32 // jnp.dtype(dtype).itemsize)


def _choose_tile(dim, align, max_tile):
    """Largest multiple of `align` that divides round_up(dim, align) and is
    <= max_tile.  Tiles therefore always divide the minimally padded dim:
    no tile-induced zero-padding work, minimal (or zero) jnp.pad."""
    padded = _round_up(dim, align)
    best = align
    t = align
    limit = min(max_tile, padded)
    while t <= limit:
        if padded % t == 0:
            best = t
        t += align
    return best, padded


def _nt_dot(x_tile, w_tile):
    # x: (tm, tk), W in native (out, in) layout: (tn, tk).  Contract on K.
    # Mosaic feeds the transposed operand to the MXU directly (no vxpose).
    return jax.lax.dot_general(
        x_tile, w_tile,
        dimension_numbers=(((1,), (1,)), ((), ())),
        preferred_element_type=jnp.float32,
    )


def _linear_kernel_f32(x_ref, w_ref, b_ref, o_ref):
    """f32 output: accumulate directly in the K-resident output block."""
    @pl.when(pl.program_id(2) == 0)
    def _init():
        o_ref[...] = jnp.broadcast_to(b_ref[...], o_ref.shape)

    o_ref[...] += _nt_dot(x_ref[...], w_ref[...])


def _linear_kernel_scratch(x_ref, w_ref, b_ref, o_ref, acc_ref):
    """Narrow output dtypes: f32 VMEM accumulator, cast + store on last K."""
    k = pl.program_id(2)

    @pl.when(k == 0)
    def _init():
        acc_ref[...] = jnp.broadcast_to(b_ref[...], acc_ref.shape)

    acc_ref[...] += _nt_dot(x_ref[...], w_ref[...])

    @pl.when(k == pl.num_programs(2) - 1)
    def _finalize():
        o_ref[...] = acc_ref[...].astype(o_ref.dtype)


@functools.partial(jax.jit, static_argnames=("tm_max", "tn_max", "tk_max"))
def linear_pallas(x, weight, bias, *, tm_max=512, tn_max=512, tk_max=2048):
    """PyTorch nn.Linear forward: x:(B,K), weight:(N,K), bias:(N,) -> (B,N)."""
    B, K = x.shape
    N, K2 = weight.shape
    assert K == K2, "weight in_features must match x"

    out_dtype = x.dtype
    align_m = _sublane_align(out_dtype)         # 8 for f32, 16 for bf16

    tm, Mp = _choose_tile(B, align_m, tm_max)
    tk, Kp = _choose_tile(K, 128, tk_max)
    tn, Np = _choose_tile(N, 128, tn_max)

    # v7x megacore: make sure at least one "parallel" grid axis has extent >= 2
    # when the problem is large enough to split (otherwise 2nd TC would idle).
    if Mp // tm == 1 and Np // tn == 1 and Np >= 256:
        tn, _ = _choose_tile(N, 128, Np // 2)

    # Minimal padding only (to sublane/lane alignment).  Already-aligned
    # layers take the no-copy path: no extra HBM read/write of W or x.
    xp = x if (Mp == B and Kp == K) else jnp.pad(x, ((0, Mp - B), (0, Kp - K)))
    wp = weight if (Np == N and Kp == K) else jnp.pad(
        weight, ((0, Np - N), (0, Kp - K)))
    bp = bias.astype(jnp.float32).reshape(1, N)
    if Np != N:
        bp = jnp.pad(bp, ((0, 0), (0, Np - N)))

    grid = (Mp // tm, Np // tn, Kp // tk)

    use_scratch = out_dtype != jnp.float32
    kernel = _linear_kernel_scratch if use_scratch else _linear_kernel_f32
    scratch_shapes = [pltpu.VMEM((tm, tn), jnp.float32)] if use_scratch else []

    # VMEM budget: double-buffered x/W/out tiles + resident bias (+ f32 acc).
    itx = jnp.dtype(x.dtype).itemsize
    itw = jnp.dtype(weight.dtype).itemsize
    ito = jnp.dtype(out_dtype).itemsize
    vmem_bytes = 2 * (tm * tk * itx + tn * tk * itw + tm * tn * ito + tn * 4)
    if use_scratch:
        vmem_bytes += tm * tn * 4
    # Headroom, capped at 48 MiB (safe on v7x's 64 MiB physical VMEM, and
    # raises v5e's 16 MiB default scoped limit for the large-tile configs).
    vmem_limit = max(32 * 1024 * 1024,
                     min(vmem_bytes + 8 * 1024 * 1024, 48 * 1024 * 1024))

    yp = pl.pallas_call(
        kernel,
        out_shape=jax.ShapeDtypeStruct((Mp, Np), out_dtype),
        grid=grid,
        in_specs=[
            pl.BlockSpec((tm, tk), lambda i, j, k: (i, k)),   # x tile
            pl.BlockSpec((tn, tk), lambda i, j, k: (j, k)),   # W tile (native layout)
            pl.BlockSpec((1, tn), lambda i, j, k: (0, j)),    # bias row, resident over K
        ],
        out_specs=pl.BlockSpec((tm, tn), lambda i, j, k: (i, j)),
        scratch_shapes=scratch_shapes,
        compiler_params=pltpu.CompilerParams(
            dimension_semantics=("parallel", "parallel", "arbitrary"),
            vmem_limit_bytes=vmem_limit),
    )(xp, wp, bp)

    if Mp == B and Np == N:
        return yp
    return yp[:B, :N]


if __name__ == "__main__":
    key = jax.random.PRNGKey(0)
    keys = jax.random.split(key, 9)

    # --- Small shapes consistent with the module (batch=8, in=32, out=16) ---
    batch, input_size, output_size = 8, 32, 16
    bound = input_size ** -0.5
    w = jax.random.uniform(keys[0], (output_size, input_size),
                           jnp.float32, -bound, bound)
    b = jax.random.uniform(keys[1], (output_size,), jnp.float32, -bound, bound)
    x = jax.random.normal(keys[2], (batch, input_size), jnp.float32)

    y = linear_pallas(x, w, b)
    jax.block_until_ready(y)
    y_ref = x @ w.T + b
    assert jnp.allclose(y, y_ref, atol=1e-5, rtol=1e-5), "small-shape mismatch"

    # --- Larger f32 layer with 128-aligned but non-power-of-two dims:
    #     exercises multi-block N grid, in-output K accumulation, and the
    #     no-padding / no-weight-copy path (tk = full 640, tn = 128). ---
    B2, K2, N2 = 192, 640, 384
    w2 = jax.random.normal(keys[3], (N2, K2), jnp.float32) * 0.02
    b2 = jax.random.normal(keys[4], (N2,), jnp.float32) * 0.02
    x2 = jax.random.normal(keys[5], (B2, K2), jnp.float32)
    y2 = linear_pallas(x2, w2, b2)
    jax.block_until_ready(y2)
    y2_ref = x2 @ w2.T + b2
    assert jnp.allclose(y2, y2_ref, atol=1e-2, rtol=1e-2), "f32 tiled mismatch"

    # --- bf16 layer: exercises the f32-scratch-accumulator path (bf16 MXU
    #     operands, f32 accumulation, bf16 output) with 16-aligned sublanes. ---
    B3, K3, N3 = 256, 1024, 768
    w3 = (jax.random.normal(keys[6], (N3, K3), jnp.float32) * 0.02
          ).astype(jnp.bfloat16)
    b3 = (jax.random.normal(keys[7], (N3,), jnp.float32) * 0.02
          ).astype(jnp.bfloat16)
    x3 = jax.random.normal(keys[8], (B3, K3), jnp.float32).astype(jnp.bfloat16)
    y3 = linear_pallas(x3, w3, b3)
    jax.block_until_ready(y3)
    y3_ref = (jnp.dot(x3.astype(jnp.float32), w3.astype(jnp.float32).T)
              + b3.astype(jnp.float32))
    err = jnp.max(jnp.abs(y3.astype(jnp.float32) - y3_ref))
    assert err < 5e-2, f"bf16 tiled mismatch: {err}"

    print("KERNEL_OK")
</pallas_src>

<mosaic_0001>
module attributes {stable_mosaic.version = 11 : i64} {
  func.func @_linear_kernel_f32(%arg0: i32, %arg1: i32, %arg2: i32, %arg3: memref<8x128xf32, #tpu.memory_space<vmem>>, %arg4: memref<128x128xf32, #tpu.memory_space<vmem>>, %arg5: memref<1x128xf32, #tpu.memory_space<vmem>>, %arg6: memref<8x128xf32, #tpu.memory_space<vmem>>) attributes {dimension_semantics = [#tpu.dimension_semantics<parallel>, #tpu.dimension_semantics<parallel>, #tpu.dimension_semantics<arbitrary>], iteration_bounds = array<i64: 1, 1, 1>, scalar_prefetch = 0 : i64, scratch_operands = 0 : i64, tpu.core_type = #tpu.core_type<tc>, window_params = [{transform_indices = @transform_0, window_bounds = array<i64: 8, 128>}, {transform_indices = @transform_1, window_bounds = array<i64: 128, 128>}, {transform_indices = @transform_2, window_bounds = array<i64: 1, 128>}, {transform_indices = @transform_3, window_bounds = array<i64: 8, 128>}]} {
    %c0_i32 = arith.constant 0 : i32
    %0 = arith.cmpi eq, %arg2, %c0_i32 : i32
    %1 = arith.extui %0 : i1 to i32
    %c0_i32_0 = arith.constant 0 : i32
    %2 = arith.cmpi ne, %1, %c0_i32_0 : i32
    scf.if %2 {
      %c0_8 = arith.constant 0 : index
      %c0_9 = arith.constant 0 : index
      %9 = vector.load %arg5[%c0_8, %c0_9] : memref<1x128xf32, #tpu.memory_space<vmem>>, vector<1x128xf32>
      %10 = vector.shape_cast %9 : vector<1x128xf32> to vector<1x128xf32>
      %11 = vector.broadcast %10 : vector<1x128xf32> to vector<8x128xf32>
      %c0_10 = arith.constant 0 : index
      %c0_11 = arith.constant 0 : index
      %12 = vector.load %arg6[%c0_10, %c0_11] : memref<8x128xf32, #tpu.memory_space<vmem>>, vector<8x128xf32>
      tpu.vector_store %arg6[%c0_10, %c0_11], %11 {strides = array<i32>} : memref<8x128xf32, #tpu.memory_space<vmem>>, vector<8x128xf32>,
    } else {
    }
    %c0 = arith.constant 0 : index
    %c0_1 = arith.constant 0 : index
    %3 = vector.load %arg6[%c0, %c0_1] : memref<8x128xf32, #tpu.memory_space<vmem>>, vector<8x128xf32>
    %c0_2 = arith.constant 0 : index
    %c0_3 = arith.constant 0 : index
    %4 = vector.load %arg3[%c0_2, %c0_3] : memref<8x128xf32, #tpu.memory_space<vmem>>, vector<8x128xf32>
    %c0_4 = arith.constant 0 : index
    %c0_5 = arith.constant 0 : index
    %5 = vector.load %arg4[%c0_4, %c0_5] : memref<128x128xf32, #tpu.memory_space<vmem>>, vector<128x128xf32>
    %cst = arith.constant dense<0.000000e+00> : vector<8x128xf32>
    %6 = tpu.matmul %4, %5, %cst {dimension_numbers = #tpu.dot_dimension_numbers<[1], [1], [0], [0], [0, 0, 1, 0], [], []>} : vector<8x128xf32>, vector<128x128xf32>, vector<8x128xf32> -> vector<8x128xf32>
    %7 = arith.addf %3, %6 : vector<8x128xf32>
    %c0_6 = arith.constant 0 : index
    %c0_7 = arith.constant 0 : index
    %8 = vector.load %arg6[%c0_6, %c0_7] : memref<8x128xf32, #tpu.memory_space<vmem>>, vector<8x128xf32>
    tpu.vector_store %arg6[%c0_6, %c0_7], %7 {strides = array<i32>} : memref<8x128xf32, #tpu.memory_space<vmem>>, vector<8x128xf32>,
    return
  }
  func.func @transform_0(%arg0: i32, %arg1: i32, %arg2: i32) -> (i32, i32) {
    %c0_i32 = arith.constant 0 : i32
    return %arg0, %arg2 : i32, i32
  }
  func.func @transform_1(%arg0: i32, %arg1: i32, %arg2: i32) -> (i32, i32) {
    %c0_i32 = arith.constant 0 : i32
    return %arg1, %arg2 : i32, i32
  }
  func.func @transform_2(%arg0: i32, %arg1: i32, %arg2: i32) -> (i32, i32) {
    %c0_i32 = arith.constant 0 : i32
    %c0_i32_0 = arith.constant 0 : i32
    return %c0_i32, %arg1 : i32, i32
  }
  func.func @transform_3(%arg0: i32, %arg1: i32, %arg2: i32) -> (i32, i32) {
    %c0_i32 = arith.constant 0 : i32
    return %arg0, %arg1 : i32, i32
  }
}

</mosaic_0001>

<llo_original>
// kernel: linear_pallas.1
$region0: #{linear_pallas.1}
  #allocation0 [shape = 'u32[]', space=smem, size = 0x4, offset = 0x4, fixed_abs, tag = 'smem constant byte address 0x4 - core index']
  #allocation1 [shape = 'u32[144,128]{1,0:T(1,128)}', space=vmem, size = 0x12000, scoped, tag = 'internal scratch']
  %s0 = inlined_call_operand.vmem [shape: f32[8,128], index: 0, kind: input, shape index: {}]
  %s1 = inlined_call_operand.vmem [shape: f32[128,128], index: 1, kind: input, shape index: {}]
  %s2 = inlined_call_operand.vmem [shape: f32[1,128], index: 2, kind: input, shape index: {}]
  %s3 = inlined_call_operand.hbm [shape: f32[8,128], index: 3, kind: output, shape index: {}]
  %s4 = sld [smem:[#allocation0]]
  $region26: #{linear_pallas.1} parent=0
    _
  %s6 = ssub.s32 1, %s4
  %s7 = scalar_select 0, %s6, %s4
  $region1: #{linear_pallas.1} parent=0
    #allocation2 [shape = 'u8[4096]{0}', space=vmem, size = 0x1000, scoped, tag = 'output window, operand 0, single buffered']
    #allocation3 [shape = 's32[1]{0}', space=sflag, size = 0x4, scoped, tag = 'scoped memory for linear_pallas.1']
    %8 = vsyncpa [#allocation3], 0
    // Predicated region
    $region2: #{linear_pallas.1} parent=1 // pred_check
      _
    $region3: #{linear_pallas.1} parent=1 // pred_check_branch
      %10 = sbr.rel (0) target = $region5
    $region4: #{linear_pallas.1} parent=1 // pred_region
      _
    $region5: #{linear_pallas.1} parent=1 // pred_fallthru
      _
    // Predicated region
    $region6: #{linear_pallas.1} parent=1 // pred_check
      _
    $region7: #{linear_pallas.1} parent=1 // pred_check_branch
      %12 = sbr.rel (0) target = $region9
    $region8: #{linear_pallas.1} parent=1 // pred_region
      _
    $region9: #{linear_pallas.1} parent=1 // pred_fallthru
      _
    // Predicated region
    $region10: #{linear_pallas.1} parent=1 // pred_check
      _
    $region11: #{linear_pallas.1} parent=1 // pred_check_branch
      %14 = sbr.rel (0) target = $region13
    $region12: #{linear_pallas.1} parent=1 // pred_region
      _
    $region13: #{linear_pallas.1} parent=1 // pred_fallthru
      _
    %p15 = scmp.eq.s32.totalorder 0, 0
    // Predicated region
    $region14: #{linear_pallas.1} parent=1 // pred_check
      %p16 = pneg %p15
    $region15: #{linear_pallas.1} parent=1 // pred_check_branch
      %18 = sbr.rel (%p16) target = $region17
    $region16: #{linear_pallas.1} parent=1 // pred_region
      %v19 = vld [vmem:[%s2] sm:$0x1]
      %v21 = vlaneseq
      %v22 = vshrl.u32 %v21, 7
      %v23 = vsub.s32 0, %v22
      %v24 = vrot.slane %v19, %v23
      %26 = vst [vmem:[#allocation2] sm:$0xff] %v24
    $region17: #{linear_pallas.1} parent=1 // pred_fallthru
      _
    %v27 = vld [vmem:[#allocation2] sm:$0xff]
    %v28 = vld [vmem:[%s0] sm:$0xff]
    %v29 = vld [vmem:[%s1] sm:$0xff]
    %v30 = vld [vmem:[%s1 + $0x8] sm:$0xff]
    %v31 = vld [vmem:[%s1 + $0x10] sm:$0xff]
    %v32 = vld [vmem:[%s1 + $0x18] sm:$0xff]
    %v33 = vld [vmem:[%s1 + $0x20] sm:$0xff]
    %v34 = vld [vmem:[%s1 + $0x28] sm:$0xff]
    %v35 = vld [vmem:[%s1 + $0x30] sm:$0xff]
    %v36 = vld [vmem:[%s1 + $0x38] sm:$0xff]
    %v37 = vld [vmem:[%s1 + $0x40] sm:$0xff]
    %v38 = vld [vmem:[%s1 + $0x48] sm:$0xff]
    %v39 = vld [vmem:[%s1 + $0x50] sm:$0xff]
    %v40 = vld [vmem:[%s1 + $0x58] sm:$0xff]
    %v41 = vld [vmem:[%s1 + $0x60] sm:$0xff]
    %v42 = vld [vmem:[%s1 + $0x68] sm:$0xff]
    %v43 = vld [vmem:[%s1 + $0x70] sm:$0xff]
    %v44 = vld [vmem:[%s1 + $0x78] sm:$0xff]
    %45 = vmatprep.subr.mxu0 0.0
    %46 = vmatpush1.xpose.msra.mxu0 %v29
    %47 = vmatprep.subr.mxu0 0.0
    %48 = vmatpush1.xpose.msra.mxu0 %v30
    %49 = vmatprep.subr.mxu0 0.0
    %50 = vmatpush1.xpose.msra.mxu0 %v31
    %51 = vmatprep.subr.mxu0 0.0
    %52 = vmatpush1.xpose.msra.mxu0 %v32
    %53 = vmatprep.subr.mxu0 0.0
    %54 = vmatpush1.xpose.msra.mxu0 %v33
    %55 = vmatprep.subr.mxu0 0.0
    %56 = vmatpush1.xpose.msra.mxu0 %v34
    %57 = vmatprep.subr.mxu0 0.0
    %58 = vmatpush1.xpose.msra.mxu0 %v35
    %59 = vmatprep.subr.mxu0 0.0
    %60 = vmatpush1.xpose.msra.mxu0 %v36
    %61 = vmatprep.subr.mxu0 0.0
    %62 = vmatpush1.xpose.msra.mxu0 %v37
    %63 = vmatprep.subr.mxu0 0.0
    %64 = vmatpush1.xpose.msra.mxu0 %v38
    %65 = vmatprep.subr.mxu0 0.0
    %66 = vmatpush1.xpose.msra.mxu0 %v39
    %67 = vmatprep.subr.mxu0 0.0
    %68 = vmatpush1.xpose.msra.mxu0 %v40
    %69 = vmatprep.subr.mxu0 0.0
    %70 = vmatpush1.xpose.msra.mxu0 %v41
    %71 = vmatprep.subr.mxu0 0.0
    %72 = vmatpush1.xpose.msra.mxu0 %v42
    %73 = vmatprep.subr.mxu0 0.0
    %74 = vmatpush1.xpose.msra.mxu0 %v43
    %75 = vmatprep.subr.mxu0 0.0
    %76 = vmatpush1.xpose.msra.mxu0 %v44
    %77 = vmatprep.subr.mxu0 0.0
    %78 = vmatpush1.xpose.msra.mxu0 0.0
    %79 = vmatprep.subr.mxu0 0.0
    %80 = vmatpush1.xpose.msra.mxu0 0.0
    %81 = vmatprep.subr.mxu0 0.0
    %82 = vmatpush1.xpose.msra.mxu0 0.0
    %83 = vmatprep.subr.mxu0 0.0
    %84 = vmatpush1.xpose.msra.mxu0 0.0
    %85 = vmatprep.subr.mxu0 0.0
    %86 = vmatpush1.xpose.msra.mxu0 0.0
    %87 = vmatprep.subr.mxu0 0.0
    %88 = vmatpush1.xpose.msra.mxu0 0.0
    %89 = vmatprep.subr.mxu0 0.0
    %90 = vmatpush1.xpose.msra.mxu0 0.0
    %91 = vmatprep.subr.mxu0 0.0
    %92 = vmatpush1.xpose.msra.mxu0 0.0
    %93 = vmatprep.subr.mxu0 0.0
    %94 = vmatpush1.xpose.msra.mxu0 0.0
    %95 = vmatprep.subr.mxu0 0.0
    %96 = vmatpush1.xpose.msra.mxu0 0.0
    %97 = vmatprep.subr.mxu0 0.0
    %98 = vmatpush1.xpose.msra.mxu0 0.0
    %99 = vmatprep.subr.mxu0 0.0
    %100 = vmatpush1.xpose.msra.mxu0 0.0
    %101 = vmatprep.subr.mxu0 0.0
    %102 = vmatpush1.xpose.msra.mxu0 0.0
    %103 = vmatprep.subr.mxu0 0.0
    %104 = vmatpush1.xpose.msra.mxu0 0.0
    %105 = vmatprep.subr.mxu0 0.0
    %106 = vmatpush1.xpose.msra.mxu0 0.0
    %107 = vmatprep.subr.mxu0 0.0
    %108 = vmatpush1.xpose.msra.mxu0 0.0
    %109 = vmatprep.mubr.f32.mxu0 0.0
    %110 = vmatmul.mubr.f32.gmra.mrb[0].mxu0 %v28
    %v111 = vpop.f32.mrb[0].mxu0
    %v112 = vadd.f32 0.0, %v111
    %v113 = vpop.f32.mrb[0].mxu0
    %114 = vdwg.mxu0
    %v115 = vadd.f32 %v27, %v112
    %116 = vst [vmem:[#allocation2] sm:$0xff] %v115
    // Predicated region
    $region18: #{linear_pallas.1} parent=1 // pred_check
      _
    $region19: #{linear_pallas.1} parent=1 // pred_check_branch
      %118 = sbr.rel (0) target = $region21
    $region20: #{linear_pallas.1} parent=1 // pred_region
      %s120 = ssub.s32 128, 128
      %121 = vsyncadd [#allocation3], %s120
      %s123 = sshll.u32 [#allocation2], 4
      %s124 = int_to_ptr.vmem [resolvable:$true] %s123
      %126 = dma.vmem_to_hbm [thread:$0]  %s124, 128, %s3, [#allocation3]
    $region21: #{linear_pallas.1} parent=1 // pred_fallthru
      _
    // Predicated region
    $region22: #{linear_pallas.1} parent=1 // pred_check
      _
    $region23: #{linear_pallas.1} parent=1 // pred_check_branch
      %128 = sbr.rel (0) target = $region25
    $region24: #{linear_pallas.1} parent=1 // pred_region
      %129 = dma.done [#allocation3], 128
    $region25: #{linear_pallas.1} parent=1 // pred_fallthru
      _
    %130 = vsyncpa [#allocation3], 1

</llo_original>
